<compile_context>
chip_gen: v5e
topology: v5e:2x2
jax: 0.10.0
libtpu: 0.0.40
codegen_flags: <defaults>
</compile_context>

<pallas_src>
import jax
import jax.numpy as jnp
from jax.experimental import pallas as pl
from jax.experimental.pallas import tpu as pltpu

_LANE = 128  # TPU vreg lane width


def _make_scale_shift_kernel(scale: float, shift: float):
    """Kernel factory: scale/shift baked in as trace-time constants."""

    def kernel(x_ref, o_ref):
        # Weak-typed Python scalars keep the compute in x's dtype.
        o_ref[...] = (x_ref[...] * scale + shift).astype(o_ref.dtype)

    return kernel


def scale_shift_forward(x, scale, shift, *, tm=8192, donate_x=False):
    """Pallas TPU implementation of ScaleShiftBlock.forward: scale * x + shift.

    Accepts any input shape; internally views the data as a lane-dense
    (rows, 128) slab.  Pads only when x.size is not 128-divisible.
    """
    if x.size == 0:
        return x

    orig_shape = x.shape
    dtype = x.dtype
    n = x.size
    itemsize = jnp.dtype(dtype).itemsize
    # Packed-sublane multiple: f32 -> 8, bf16/f16 -> 16, int8/fp8 -> 32.
    pack = {4: 8, 2: 16, 1: 32}.get(itemsize, 8)

    x_flat = jnp.ravel(x)
    n_padded = ((n + _LANE - 1) // _LANE) * _LANE
    padded = n_padded != n
    if padded:
        x_flat = jnp.pad(x_flat, (0, n_padded - n))
    rows = n_padded // _LANE
    x2d = x_flat.reshape(rows, _LANE)

    if rows <= tm:
        # Single grid step: block equals full array extent (always legal).
        tm_eff = rows
    else:
        # Large tile, rounded to the dtype's packed-sublane multiple.
        tm_eff = max(pack, (tm // pack) * pack)
    grid = (pl.cdiv(rows, tm_eff),)

    kernel = _make_scale_shift_kernel(float(scale), float(shift))

    out2d = pl.pallas_call(
        kernel,
        out_shape=jax.ShapeDtypeStruct((rows, _LANE), dtype),
        grid=grid,
        in_specs=[pl.BlockSpec((tm_eff, _LANE), lambda i: (i, 0))],
        out_specs=pl.BlockSpec((tm_eff, _LANE), lambda i: (i, 0)),
        compiler_params=pltpu.CompilerParams(
            dimension_semantics=("parallel",),
            # 4 MiB tiles, double-buffered in + out ~= 16 MiB of pipeline
            # buffers; raise the scoped limit so this fits on v5e's 16 MiB
            # default while staying well under v7x's 64 MiB physical VMEM.
            vmem_limit_bytes=40 << 20,
        ),
        cost_estimate=pl.CostEstimate(
            flops=2 * n_padded,
            transcendentals=0,
            bytes_accessed=2 * n_padded * itemsize,
        ),
        input_output_aliases={0: 0} if donate_x else {},
    )(x2d)

    out_flat = out2d.reshape(n_padded)
    if padded:
        out_flat = out_flat[:n]
    return out_flat.reshape(orig_shape)


if __name__ == "__main__":
    key = jax.random.PRNGKey(0)

    # Small example consistent with an arbitrary feature tensor fed to
    # ScaleShiftBlock: (batch=2, channels=4, spatial=16x16) float32.
    x = jax.random.normal(key, (2, 4, 16, 16), dtype=jnp.float32)
    scale = 2.5
    shift = -0.75

    out = scale_shift_forward(x, scale, shift)
    out = jax.block_until_ready(out)

    # Reference: plain JAX, same semantics as torch `self.scale * x + self.shift`.
    ref = scale * x + shift
    assert out.shape == x.shape
    assert out.dtype == x.dtype
    assert jnp.allclose(out, ref, atol=1e-6, rtol=1e-6)

    print("KERNEL_OK")
</pallas_src>

<mosaic_0001>
module attributes {stable_mosaic.version = 11 : i64} {
  func.func @kernel(%arg0: i32, %arg1: memref<16x128xf32, #tpu.memory_space<vmem>>, %arg2: memref<16x128xf32, #tpu.memory_space<vmem>>) attributes {dimension_semantics = [#tpu.dimension_semantics<parallel>], iteration_bounds = array<i64: 1>, scalar_prefetch = 0 : i64, scratch_operands = 0 : i64, tpu.core_type = #tpu.core_type<tc>, window_params = [{transform_indices = @transform_0, window_bounds = array<i64: 16, 128>}, {transform_indices = @transform_1, window_bounds = array<i64: 16, 128>}]} {
    %c0 = arith.constant 0 : index
    %c0_0 = arith.constant 0 : index
    %0 = vector.load %arg1[%c0, %c0_0] : memref<16x128xf32, #tpu.memory_space<vmem>>, vector<16x128xf32>
    %cst = arith.constant 2.500000e+00 : f32
    %1 = vector.broadcast %cst : f32 to vector<16x128xf32>
    %2 = arith.mulf %0, %1 : vector<16x128xf32>
    %cst_1 = arith.constant -7.500000e-01 : f32
    %3 = vector.broadcast %cst_1 : f32 to vector<16x128xf32>
    %4 = arith.addf %2, %3 : vector<16x128xf32>
    %c0_2 = arith.constant 0 : index
    %c0_3 = arith.constant 0 : index
    %5 = vector.load %arg2[%c0_2, %c0_3] : memref<16x128xf32, #tpu.memory_space<vmem>>, vector<16x128xf32>
    tpu.vector_store %arg2[%c0_2, %c0_3], %4 {strides = array<i32>} : memref<16x128xf32, #tpu.memory_space<vmem>>, vector<16x128xf32>,
    return
  }
  func.func @transform_0(%arg0: i32) -> (i32, i32) {
    %c0_i32 = arith.constant 0 : i32
    %c0_i32_0 = arith.constant 0 : i32
    return %arg0, %c0_i32 : i32, i32
  }
  func.func @transform_1(%arg0: i32) -> (i32, i32) {
    %c0_i32 = arith.constant 0 : i32
    %c0_i32_0 = arith.constant 0 : i32
    return %arg0, %c0_i32 : i32, i32
  }
}

</mosaic_0001>

<llo_original>
// kernel: tpu_custom_call.1
$region0: #{tpu_custom_call.1}
  #allocation0 [shape = 'u32[]', space=smem, size = 0x4, offset = 0x4, fixed_abs, tag = 'smem constant byte address 0x4 - core index']
  #allocation1 [shape = 'u32[72,128]{1,0:T(1,128)}', space=vmem, size = 0x9000, scoped, tag = 'internal scratch']
  %s0 = inlined_call_operand.hbm [shape: f32[16,128], index: 0, kind: input, shape index: {}]
  %s1 = inlined_call_operand.hbm [shape: f32[16,128], index: 1, kind: output, shape index: {}]
  %s2 = sld [smem:[#allocation0]]
  $region18: #{tpu_custom_call.1} parent=0
    _
  %s4 = ssub.s32 1, %s2
  %s5 = scalar_select 0, %s4, %s2
  $region1: #{tpu_custom_call.1} parent=0
    #allocation2 [shape = 'u8[8192]{0}', space=vmem, size = 0x2000, scoped, tag = 'input window, operand 0, single buffered']
    #allocation3 [shape = 's32[1]{0}', space=sflag, size = 0x4, scoped, tag = 'scoped memory for tpu_custom_call.1']
    #allocation4 [shape = 's32[1]{0}', space=sflag, size = 0x4, scoped, tag = 'scoped memory for tpu_custom_call.1']
    #allocation5 [shape = 'u8[8192]{0}', space=vmem, size = 0x2000, scoped, tag = 'output window, operand 0, single buffered']
    %6 = vsyncpa [#allocation3], 0
    %7 = vsyncpa [#allocation4], 0
    // Predicated region
    $region2: #{tpu_custom_call.1} parent=1 // pred_check
      _
    $region3: #{tpu_custom_call.1} parent=1 // pred_check_branch
      %9 = sbr.rel (0) target = $region5
    $region4: #{tpu_custom_call.1} parent=1 // pred_region
      %11 = vsyncadd [#allocation3], 0
      %s12 = sshll.u32 %s0, 4
      %s13 = int_to_ptr.hbm [resolvable:$true] %s12
      %s14 = sshll.u32 [#allocation2], 4
      %s15 = int_to_ptr.vmem [resolvable:$true] %s14
      %20 = dma.hbm_to_vmem [thread:$0]  %s13, 256, %s15, [#allocation3], 128, 128, 8
    $region5: #{tpu_custom_call.1} parent=1 // pred_fallthru
      _
    // Predicated region
    $region6: #{tpu_custom_call.1} parent=1 // pred_check
      _
    $region7: #{tpu_custom_call.1} parent=1 // pred_check_branch
      %22 = sbr.rel (0) target = $region9
    $region8: #{tpu_custom_call.1} parent=1 // pred_region
      %24 = dma.done [#allocation3], 256
    $region9: #{tpu_custom_call.1} parent=1 // pred_fallthru
      _
    %v25 = vld [vmem:[#allocation2] sm:$0xff]
    %v26 = vld [vmem:[#allocation2 + $0x8] sm:$0xff]
    %v27 = vmul.f32 %v25, 2.5
    %v28 = vmul.f32 %v26, 2.5
    %v29 = vadd.f32 %v27, -0.75
    %v30 = vadd.f32 %v28, -0.75
    %31 = vst [vmem:[#allocation5] sm:$0xff] %v29
    %32 = vst [vmem:[#allocation5 + $0x8] sm:$0xff] %v30
    // Predicated region
    $region10: #{tpu_custom_call.1} parent=1 // pred_check
      _
    $region11: #{tpu_custom_call.1} parent=1 // pred_check_branch
      %34 = sbr.rel (0) target = $region13
    $region12: #{tpu_custom_call.1} parent=1 // pred_region
      %36 = vsyncadd [#allocation4], 0
      %s37 = sshll.u32 [#allocation5], 4
      %s38 = int_to_ptr.vmem [resolvable:$true] %s37
      %s39 = sshll.u32 %s1, 4
      %s40 = int_to_ptr.hbm [resolvable:$true] %s39
      %45 = dma.vmem_to_hbm [thread:$0]  %s38, 256, %s40, [#allocation4], 128, 128, 8
    $region13: #{tpu_custom_call.1} parent=1 // pred_fallthru
      _
    // Predicated region
    $region14: #{tpu_custom_call.1} parent=1 // pred_check
      _
    $region15: #{tpu_custom_call.1} parent=1 // pred_check_branch
      %47 = sbr.rel (0) target = $region17
    $region16: #{tpu_custom_call.1} parent=1 // pred_region
      %49 = dma.done [#allocation4], 256
    $region17: #{tpu_custom_call.1} parent=1 // pred_fallthru
      _
    %50 = vsyncpa [#allocation3], 1
    %51 = vsyncpa [#allocation4], 1

</llo_original>
